<compile_context>
chip_gen: v7x
topology: tpu7x:2x2x1
jax: 0.10.0
libtpu: 0.0.40
codegen_flags: <defaults>
</compile_context>

<pallas_src>
import jax
import jax.numpy as jnp
from jax.experimental import pallas as pl
from jax.experimental.pallas import tpu as pltpu


def _copy_kernel(x_ref, o_ref):
    # Trim fully expressed by the BlockSpecs: straight lane-dense vld/vst.
    o_ref[...] = x_ref[...]


def _slice_copy_kernel(x_ref, o_ref):
    # Input block is slightly wider than the output block (<=127 extra lanes
    # or the full row); trim with a static slice in VMEM.
    o_ref[...] = x_ref[:, : o_ref.shape[1]]


def _round_down(x: int, m: int) -> int:
    return (x // m) * m


def _round_up(x: int, m: int) -> int:
    return ((x + m - 1) // m) * m


def chomp1d(x: jax.Array, chomp_size: int, *,
            vmem_budget_bytes: int = 12 * 1024 * 1024) -> jax.Array:
    """Pallas equivalent of Chomp1d.forward: x[:, :, :-chomp_size].

    chomp_size == 0 is rejected (PyTorch's `:-0` would yield an empty tensor,
    which is never what the TCN intends).
    """
    assert chomp_size > 0, "chomp_size must be positive"
    n, c, l = x.shape
    l_out = l - chomp_size
    assert l_out > 0, "chomp_size must be smaller than the length dimension"

    # Flatten (N, C, L) -> (N*C, L): sublane-dense rows even when C < 8.
    r = n * c
    x2 = x.reshape(r, l)
    itemsize = jnp.dtype(x.dtype).itemsize
    # Packed-sublane multiple: 8 for f32, 16 for bf16, 32 for int8/fp8.
    sub = max(8, 8 * (4 // itemsize))

    # Lane extent of the input block in the full-row path: cover [0, l_out)
    # with a 128-aligned block when possible, else read the full row.
    if l_out % 128 == 0:
        l_in_blk = l_out                      # exact: pure copy, no over-read
    elif _round_up(l_out, 128) <= l:
        l_in_blk = _round_up(l_out, 128)      # <=127 lanes of over-read
    else:
        l_in_blk = l                          # full row (over-read = chomp)

    # Double-buffered (in + out) bytes per row of a full-row block.
    per_row_bytes = 2 * (l_in_blk + l_out) * itemsize
    tr_budget = vmem_budget_bytes // per_row_bytes

    if tr_budget >= r or tr_budget >= sub:
        # --- Full-row path: 1-D grid over rows, contiguous output blocks. ---
        tr = r if tr_budget >= r else _round_down(tr_budget, sub)
        # v7x megacore: give both TensorCores a row block when it matters.
        out_bytes = r * l_out * itemsize
        if tr == r and r >= 2 * sub and out_bytes >= (1 << 20):
            tr = _round_up(pl.cdiv(r, 2), sub)
        grid = (pl.cdiv(r, tr),)
        kernel = _copy_kernel if l_in_blk == l_out else _slice_copy_kernel
        in_specs = [pl.BlockSpec((tr, l_in_blk), lambda i: (i, 0))]
        out_specs = pl.BlockSpec((tr, l_out), lambda i: (i, 0))
        bytes_accessed = r * (l_in_blk + l_out) * itemsize
    else:
        # --- Fallback for extremely long rows: tile lanes too. ---
        # (Only reached when even `sub` rows x full row blows the budget, so
        # l_out here is guaranteed to be >= 128.)
        tr = r if r < sub else sub
        tl_budget = max(128, vmem_budget_bytes // (4 * tr * itemsize))
        tl = max(128, min(_round_down(tl_budget, 128), _round_down(l_out, 128)))
        grid = (pl.cdiv(r, tr), pl.cdiv(l_out, tl))
        kernel = _copy_kernel
        in_specs = [pl.BlockSpec((tr, tl), lambda i, j: (i, j))]
        out_specs = pl.BlockSpec((tr, tl), lambda i, j: (i, j))
        bytes_accessed = 2 * r * l_out * itemsize

    y2 = pl.pallas_call(
        kernel,
        out_shape=jax.ShapeDtypeStruct((r, l_out), x.dtype),
        grid=grid,
        in_specs=in_specs,
        out_specs=out_specs,
        compiler_params=pltpu.CompilerParams(
            dimension_semantics=("parallel",) * len(grid)),
        cost_estimate=pl.CostEstimate(
            flops=0, transcendentals=0, bytes_accessed=bytes_accessed),
    )(x2)

    return y2.reshape(n, c, l_out)


if __name__ == "__main__":
    key = jax.random.PRNGKey(0)

    # 1) Small TCN-like shape: Conv1d with padding=(k-1)*d leaves extra
    #    trailing timesteps that Chomp1d removes. batch=2, channels=4,
    #    padded length=24, chomp=8.
    N, C, L, CHOMP = 2, 4, 24, 8
    x = jax.random.normal(key, (N, C, L), dtype=jnp.float32)
    y = jax.block_until_ready(chomp1d(x, CHOMP))
    assert y.shape == (N, C, L - CHOMP), y.shape
    assert y.dtype == x.dtype
    assert jnp.array_equal(y, x[:, :, :-CHOMP]), "small-shape chomp mismatch"

    # 2) Longer sequence, l_out NOT a multiple of 128: full-row slice-copy
    #    path with full-extent lane blocks (contiguous output stores).
    x_b = jax.random.normal(jax.random.PRNGKey(0), (2, 4, 336), dtype=jnp.float32)
    y_b = jax.block_until_ready(chomp1d(x_b, 16))
    assert y_b.shape == (2, 4, 320), y_b.shape
    assert jnp.array_equal(y_b, x_b[:, :, :-16]), "full-row slice chomp mismatch"

    # 3) l_out a multiple of 128 and r > 8 rows: pure-copy kernel with zero
    #    over-read of the chomped tail.
    x_c = jax.random.normal(jax.random.PRNGKey(0), (4, 8, 640), dtype=jnp.float32)
    y_c = jax.block_until_ready(chomp1d(x_c, 128))
    assert y_c.shape == (4, 8, 512), y_c.shape
    assert jnp.array_equal(y_c, x_c[:, :, :-128]), "aligned copy chomp mismatch"

    # 4) bf16 activations: exercises the packed-sublane (16-row) alignment.
    x_h = jax.random.normal(jax.random.PRNGKey(0), (2, 4, 24), dtype=jnp.bfloat16)
    y_h = jax.block_until_ready(chomp1d(x_h, 8))
    assert y_h.shape == (2, 4, 16) and y_h.dtype == jnp.bfloat16
    assert jnp.array_equal(y_h, x_h[:, :, :-8]), "bf16 chomp mismatch"

    print("KERNEL_OK")
</pallas_src>

<mosaic_0001>
module attributes {stable_mosaic.version = 11 : i64} {
  func.func @_slice_copy_kernel(%arg0: i32, %arg1: memref<8x24xf32, #tpu.memory_space<vmem>>, %arg2: memref<8x16xf32, #tpu.memory_space<vmem>>) attributes {dimension_semantics = [#tpu.dimension_semantics<parallel>], iteration_bounds = array<i64: 1>, scalar_prefetch = 0 : i64, scratch_operands = 0 : i64, tpu.core_type = #tpu.core_type<tc>, window_params = [{transform_indices = @transform_0, window_bounds = array<i64: 8, 24>}, {transform_indices = @transform_1, window_bounds = array<i64: 8, 16>}]} {
    %c0 = arith.constant 0 : index
    %c0_0 = arith.constant 0 : index
    %0 = vector.load %arg1[%c0, %c0_0] : memref<8x24xf32, #tpu.memory_space<vmem>>, vector<8x16xf32>
    %c0_1 = arith.constant 0 : index
    %c0_2 = arith.constant 0 : index
    %1 = vector.load %arg2[%c0_1, %c0_2] : memref<8x16xf32, #tpu.memory_space<vmem>>, vector<8x16xf32>
    tpu.vector_store %arg2[%c0_1, %c0_2], %0 {strides = array<i32>} : memref<8x16xf32, #tpu.memory_space<vmem>>, vector<8x16xf32>,
    return
  }
  func.func @transform_0(%arg0: i32) -> (i32, i32) {
    %c0_i32 = arith.constant 0 : i32
    %c0_i32_0 = arith.constant 0 : i32
    return %arg0, %c0_i32 : i32, i32
  }
  func.func @transform_1(%arg0: i32) -> (i32, i32) {
    %c0_i32 = arith.constant 0 : i32
    %c0_i32_0 = arith.constant 0 : i32
    return %arg0, %c0_i32 : i32, i32
  }
}

</mosaic_0001>

<llo_original>
// kernel: tpu_custom_call.1
$region0: #{tpu_custom_call.1}
  #allocation0 [shape = 'u32[]', space=smem, size = 0x4, offset = 0x4, fixed_abs, tag = 'smem constant byte address 0x4 - core index']
  #allocation1 [shape = 'u32[144,128]{1,0:T(1,128)}', space=vmem, size = 0x12000, scoped, tag = 'internal scratch']
  %s0 = inlined_call_operand.hbm [shape: f32[8,24], index: 0, kind: input, shape index: {}]
  %s1 = inlined_call_operand.hbm [shape: f32[8,16], index: 1, kind: output, shape index: {}]
  %s2 = sld [smem:[#allocation0]]
  $region18: #{tpu_custom_call.1} parent=0
    _
  %s4 = ssub.s32 1, %s2
  %s5 = scalar_select 0, %s4, %s2
  $region1: #{tpu_custom_call.1} parent=0
    #allocation2 [shape = 'u8[4096]{0}', space=vmem, size = 0x1000, scoped, tag = 'input window, operand 0, single buffered']
    #allocation3 [shape = 's32[1]{0}', space=sflag, size = 0x4, scoped, tag = 'scoped memory for tpu_custom_call.1']
    #allocation4 [shape = 's32[1]{0}', space=sflag, size = 0x4, scoped, tag = 'scoped memory for tpu_custom_call.1']
    #allocation5 [shape = 'u8[4096]{0}', space=vmem, size = 0x1000, scoped, tag = 'output window, operand 0, single buffered']
    %6 = vsyncpa [#allocation3], 0
    %7 = vsyncpa [#allocation4], 0
    // Predicated region
    $region2: #{tpu_custom_call.1} parent=1 // pred_check
      _
    $region3: #{tpu_custom_call.1} parent=1 // pred_check_branch
      %9 = sbr.rel (0) target = $region5
    $region4: #{tpu_custom_call.1} parent=1 // pred_region
      %s11 = ssub.s32 128, 128
      %12 = vsyncadd [#allocation3], %s11
      %s14 = sshll.u32 [#allocation2], 4
      %s15 = int_to_ptr.vmem [resolvable:$true] %s14
      %17 = dma.hbm_to_vmem [thread:$0]  %s0, 128, %s15, [#allocation3]
    $region5: #{tpu_custom_call.1} parent=1 // pred_fallthru
      _
    // Predicated region
    $region6: #{tpu_custom_call.1} parent=1 // pred_check
      _
    $region7: #{tpu_custom_call.1} parent=1 // pred_check_branch
      %19 = sbr.rel (0) target = $region9
    $region8: #{tpu_custom_call.1} parent=1 // pred_region
      %20 = dma.done [#allocation3], 128
    $region9: #{tpu_custom_call.1} parent=1 // pred_fallthru
      _
    %v21 = vld [vmem:[#allocation2] sm:$0xff]
    %vm22 = vcmask 130048
    %23 = vst.msk [vmem:[#allocation5] sm:$0xff] %vm22, %v21
    // Predicated region
    $region10: #{tpu_custom_call.1} parent=1 // pred_check
      _
    $region11: #{tpu_custom_call.1} parent=1 // pred_check_branch
      %25 = sbr.rel (0) target = $region13
    $region12: #{tpu_custom_call.1} parent=1 // pred_region
      %s27 = ssub.s32 128, 128
      %28 = vsyncadd [#allocation4], %s27
      %s30 = sshll.u32 [#allocation5], 4
      %s31 = int_to_ptr.vmem [resolvable:$true] %s30
      %33 = dma.vmem_to_hbm [thread:$0]  %s31, 128, %s1, [#allocation4]
    $region13: #{tpu_custom_call.1} parent=1 // pred_fallthru
      _
    // Predicated region
    $region14: #{tpu_custom_call.1} parent=1 // pred_check
      _
    $region15: #{tpu_custom_call.1} parent=1 // pred_check_branch
      %35 = sbr.rel (0) target = $region17
    $region16: #{tpu_custom_call.1} parent=1 // pred_region
      %36 = dma.done [#allocation4], 128
    $region17: #{tpu_custom_call.1} parent=1 // pred_fallthru
      _
    %37 = vsyncpa [#allocation3], 1
    %38 = vsyncpa [#allocation4], 1

</llo_original>
